<compile_context>
chip_gen: v7x
topology: tpu7x:2x2x1
jax: 0.10.0
libtpu: 0.0.40
codegen_flags: <defaults>
</compile_context>

<pallas_src>
import jax
import jax.numpy as jnp
from jax import lax
from jax.experimental import pallas as pl
from jax.experimental.pallas import tpu as pltpu


def _intersection_kernel(pred_ref, gt_ref, out_ref, acc_ref):
    # pred_ref: (1, C, TP) float   gt_ref: (1, 1, TP) int32
    # out_ref:  (1, 1, C)  int32   acc_ref: (C, TP) int32 scratch
    p = pl.program_id(1)

    @pl.when(p == 0)
    def _init():
        acc_ref[...] = jnp.zeros_like(acc_ref)

    pred = pred_ref[0]                                        # (C, TP)
    gt = gt_ref[0]                                            # (1, TP)
    C, TP = pred.shape

    class_iota = lax.broadcasted_iota(jnp.int32, (C, TP), 0)  # class id per row

    # argmax over the class (sublane) axis, first occurrence like torch.argmax,
    # expressed as max + min-of-iota reductions.
    max_val = jnp.max(pred, axis=0, keepdims=True)            # (1, TP)
    is_max = pred == max_val                                  # (C, TP)
    pred_cls = jnp.min(
        jnp.where(is_max, class_iota, jnp.int32(C)), axis=0, keepdims=True
    )                                                         # (1, TP)

    # intersection[c, t] = (argmax == c) AND (gt == c)  ==  (gt == c) AND (argmax == gt)
    match = pred_cls == gt                                    # (1, TP)
    gt_oh = class_iota == gt                                  # (C, TP)
    inter = jnp.logical_and(gt_oh, match)                     # (C, TP)

    # Elementwise accumulation (pure VPU); cross-lane reduce deferred to finalize.
    acc_ref[...] += inter.astype(jnp.int32)

    @pl.when(p == pl.num_programs(1) - 1)
    def _finalize():
        out_ref[...] = jnp.sum(acc_ref[...], axis=1).reshape(1, 1, C)


def _pick_spatial_tile(P: int, cap: int = 8192) -> int:
    """Largest spatial tile <= cap that evenly divides P (multiple of 128 if possible)."""
    if P <= cap:
        return P
    if P % 128 == 0:
        for tp in range(cap - cap % 128, 0, -128):
            if P % tp == 0:
                return tp
    return P  # fallback: single tile over the full spatial extent


def metric_intersection(pred_nchw: jax.Array, gt: jax.Array) -> jax.Array:
    """pred_nchw: (N, C, H, W) float, gt: (N, H, W) int. Returns (N, C) int32 counts."""
    N, C, H, W = pred_nchw.shape
    P = H * W

    # Natural NCHW flatten -- no transpose, no extra HBM pass.
    pred = pred_nchw.reshape(N, C, P)
    gt3 = gt.reshape(N, 1, P).astype(jnp.int32)

    TP = _pick_spatial_tile(P)
    grid = (N, P // TP)

    out = pl.pallas_call(
        _intersection_kernel,
        out_shape=jax.ShapeDtypeStruct((N, 1, C), jnp.int32),
        grid_spec=pltpu.PrefetchScalarGridSpec(
            num_scalar_prefetch=0,
            grid=grid,
            in_specs=[
                pl.BlockSpec((1, C, TP), lambda n, p: (n, 0, p)),
                pl.BlockSpec((1, 1, TP), lambda n, p: (n, 0, p)),
            ],
            out_specs=pl.BlockSpec((1, 1, C), lambda n, p: (n, 0, 0)),
            scratch_shapes=[pltpu.VMEM((C, TP), jnp.int32)],
        ),
        compiler_params=pltpu.CompilerParams(
            dimension_semantics=("parallel", "arbitrary"),
            vmem_limit_bytes=32 * 1024 * 1024,
        ),
    )(pred, gt3)
    return out.reshape(N, C)


if __name__ == "__main__":
    key = jax.random.PRNGKey(0)
    k1, k2 = jax.random.split(key)

    N, C, H, W = 2, 4, 16, 16
    pred = jax.random.normal(k1, (N, C, H, W), dtype=jnp.float32)
    gt = jax.random.randint(k2, (N, H, W), 0, C, dtype=jnp.int32)

    out = jax.block_until_ready(metric_intersection(pred, gt))

    # Pure-JAX reference mirroring the PyTorch forward exactly.
    pm = jnp.argmax(pred, axis=1)                               # (N, H, W)
    pred_oh = jax.nn.one_hot(pm, C, dtype=jnp.int32)            # (N, H, W, C)
    gt_oh = jax.nn.one_hot(gt, C, dtype=jnp.int32)              # (N, H, W, C)
    inter = jnp.logical_and(pred_oh, gt_oh)
    ref = jnp.sum(inter, axis=(1, 2)).astype(jnp.int32)         # (N, C)

    assert out.shape == (N, C) and out.dtype == jnp.int32
    assert jnp.array_equal(out, ref), (out, ref)
    print("KERNEL_OK")
</pallas_src>

<mosaic_0001>
module attributes {stable_mosaic.version = 11 : i64} {
  func.func @_intersection_kernel(%arg0: i32, %arg1: i32, %arg2: memref<1x4x256xf32, #tpu.memory_space<vmem>>, %arg3: memref<1x1x256xi32, #tpu.memory_space<vmem>>, %arg4: memref<1x1x4xi32, #tpu.memory_space<vmem>>, %arg5: memref<4x256xi32, #tpu.memory_space<vmem>>) attributes {dimension_semantics = [#tpu.dimension_semantics<parallel>, #tpu.dimension_semantics<arbitrary>], iteration_bounds = array<i64: 2, 1>, scalar_prefetch = 0 : i64, scratch_operands = 1 : i64, tpu.core_type = #tpu.core_type<tc>, window_params = [{transform_indices = @transform_0, window_bounds = array<i64: 1, 4, 256>}, {transform_indices = @transform_1, window_bounds = array<i64: 1, 1, 256>}, {transform_indices = @transform_2, window_bounds = array<i64: 1, 1, 4>}]} {
    %c0_i32 = arith.constant 0 : i32
    %0 = arith.cmpi eq, %arg1, %c0_i32 : i32
    %1 = arith.extui %0 : i1 to i32
    %c0_i32_0 = arith.constant 0 : i32
    %2 = arith.cmpi ne, %1, %c0_i32_0 : i32
    scf.if %2 {
      %c0_i32_13 = arith.constant 0 : i32
      %28 = vector.broadcast %c0_i32_13 : i32 to vector<4x256xi32>
      %c0_14 = arith.constant 0 : index
      %c0_15 = arith.constant 0 : index
      %29 = vector.load %arg5[%c0_14, %c0_15] : memref<4x256xi32, #tpu.memory_space<vmem>>, vector<4x256xi32>
      tpu.vector_store %arg5[%c0_14, %c0_15], %28 {strides = array<i32>} : memref<4x256xi32, #tpu.memory_space<vmem>>, vector<4x256xi32>,
    } else {
    }
    %c0 = arith.constant 0 : index
    %c0_1 = arith.constant 0 : index
    %c0_2 = arith.constant 0 : index
    %3 = vector.load %arg2[%c0, %c0_1, %c0_2] : memref<1x4x256xf32, #tpu.memory_space<vmem>>, vector<1x4x256xf32>
    %4 = vector.shape_cast %3 : vector<1x4x256xf32> to vector<4x256xf32>
    %c0_3 = arith.constant 0 : index
    %c0_4 = arith.constant 0 : index
    %c0_5 = arith.constant 0 : index
    %5 = vector.load %arg3[%c0_3, %c0_4, %c0_5] : memref<1x1x256xi32, #tpu.memory_space<vmem>>, vector<1x1x256xi32>
    %6 = vector.shape_cast %5 : vector<1x1x256xi32> to vector<1x256xi32>
    %7 = tpu.iota {dimensions = array<i32: 0>} : vector<4x256xi32>
    %cst = arith.constant dense<0xFF800000> : vector<256xf32>
    %8 = vector.multi_reduction <maximumf>, %4, %cst [0] : vector<4x256xf32> to vector<256xf32>
    %9 = vector.shape_cast %8 : vector<256xf32> to vector<1x256xf32>
    %10 = vector.broadcast %9 : vector<1x256xf32> to vector<4x256xf32>
    %11 = arith.cmpf oeq, %4, %10 : vector<4x256xf32>
    %c4_i32 = arith.constant 4 : i32
    %12 = vector.broadcast %c4_i32 : i32 to vector<4x256xi32>
    %13 = arith.select %11, %7, %12 : vector<4x256xi1>, vector<4x256xi32>
    %cst_6 = arith.constant dense<2147483647> : vector<256xi32>
    %14 = vector.multi_reduction <minsi>, %13, %cst_6 [0] : vector<4x256xi32> to vector<256xi32>
    %15 = vector.shape_cast %14 : vector<256xi32> to vector<1x256xi32>
    %16 = arith.cmpi eq, %15, %6 : vector<1x256xi32>
    %17 = vector.broadcast %6 : vector<1x256xi32> to vector<4x256xi32>
    %18 = arith.cmpi eq, %7, %17 : vector<4x256xi32>
    %19 = vector.broadcast %16 : vector<1x256xi1> to vector<4x256xi1>
    %20 = arith.andi %18, %19 : vector<4x256xi1>
    %c0_7 = arith.constant 0 : index
    %c0_8 = arith.constant 0 : index
    %21 = vector.load %arg5[%c0_7, %c0_8] : memref<4x256xi32, #tpu.memory_space<vmem>>, vector<4x256xi32>
    %22 = arith.extui %20 : vector<4x256xi1> to vector<4x256xi32>
    %23 = arith.addi %21, %22 : vector<4x256xi32>
    %c0_9 = arith.constant 0 : index
    %c0_10 = arith.constant 0 : index
    %24 = vector.load %arg5[%c0_9, %c0_10] : memref<4x256xi32, #tpu.memory_space<vmem>>, vector<4x256xi32>
    tpu.vector_store %arg5[%c0_9, %c0_10], %23 {strides = array<i32>} : memref<4x256xi32, #tpu.memory_space<vmem>>, vector<4x256xi32>,
    %c0_i32_11 = arith.constant 0 : i32
    %25 = arith.cmpi eq, %arg1, %c0_i32_11 : i32
    %26 = arith.extui %25 : i1 to i32
    %c0_i32_12 = arith.constant 0 : i32
    %27 = arith.cmpi ne, %26, %c0_i32_12 : i32
    scf.if %27 {
      %c0_13 = arith.constant 0 : index
      %c0_14 = arith.constant 0 : index
      %28 = vector.load %arg5[%c0_13, %c0_14] : memref<4x256xi32, #tpu.memory_space<vmem>>, vector<4x256xi32>
      %cst_15 = arith.constant dense<0> : vector<4xi32>
      %29 = vector.multi_reduction <add>, %28, %cst_15 [1] : vector<4x256xi32> to vector<4xi32>
      %30 = vector.shape_cast %29 : vector<4xi32> to vector<1x1x4xi32>
      %c0_16 = arith.constant 0 : index
      %c0_17 = arith.constant 0 : index
      %c0_18 = arith.constant 0 : index
      %31 = vector.load %arg4[%c0_16, %c0_17, %c0_18] : memref<1x1x4xi32, #tpu.memory_space<vmem>>, vector<1x1x4xi32>
      tpu.vector_store %arg4[%c0_16, %c0_17, %c0_18], %30 {strides = array<i32>} : memref<1x1x4xi32, #tpu.memory_space<vmem>>, vector<1x1x4xi32>,
    } else {
    }
    return
  }
  func.func @transform_0(%arg0: i32, %arg1: i32) -> (i32, i32, i32) {
    %c0_i32 = arith.constant 0 : i32
    %c0_i32_0 = arith.constant 0 : i32
    return %arg0, %c0_i32, %arg1 : i32, i32, i32
  }
  func.func @transform_1(%arg0: i32, %arg1: i32) -> (i32, i32, i32) {
    %c0_i32 = arith.constant 0 : i32
    %c0_i32_0 = arith.constant 0 : i32
    return %arg0, %c0_i32, %arg1 : i32, i32, i32
  }
  func.func @transform_2(%arg0: i32, %arg1: i32) -> (i32, i32, i32) {
    %c0_i32 = arith.constant 0 : i32
    %c0_i32_0 = arith.constant 0 : i32
    %c0_i32_1 = arith.constant 0 : i32
    return %arg0, %c0_i32, %c0_i32_0 : i32, i32, i32
  }
}

</mosaic_0001>

<llo_original>
// kernel: tpu_custom_call.1
$region0: #{tpu_custom_call.1}
  #allocation0 [shape = 'u32[]', space=smem, size = 0x4, offset = 0x4, fixed_abs, tag = 'smem constant byte address 0x4 - core index']
  #allocation1 [shape = 'u32[144,128]{1,0:T(1,128)}', space=vmem, size = 0x12000, scoped, tag = 'internal scratch']
  #allocation2 [shape = 's32[4,256]{1,0:T(4,128)}', space=vmem, size = 0x1000, scoped, tag = 'scratch operand']
  %s0 = inlined_call_operand.hbm [shape: f32[2,4,256], index: 0, kind: input, shape index: {}]
  %s1 = inlined_call_operand.hbm [shape: s32[2,1,256], index: 1, kind: input, shape index: {}]
  %s2 = inlined_call_operand.hbm [shape: s32[2,1,4], index: 2, kind: output, shape index: {}]
  %s3 = sld [smem:[#allocation0]]
  $region57: #{tpu_custom_call.1} parent=0
    _
  %s5 = ssub.s32 1, %s3
  %s6 = scalar_select 0, %s5, %s3
  $region1: #{tpu_custom_call.1} parent=0
    #allocation3 [shape = 'u8[8192]{0}', space=vmem, size = 0x2000, scoped, tag = 'input window, operand 0']
    #allocation4 [shape = 's32[2]{0}', space=sflag, size = 0x8, scoped, tag = 'scoped memory for tpu_custom_call.1']
    #allocation5 [shape = 's32[2]{0}', space=sflag, size = 0x8, scoped, tag = 'scoped memory for tpu_custom_call.1']
    #allocation6 [shape = 'u8[2048]{0}', space=vmem, size = 0x800, scoped, tag = 'input window, operand 1']
    #allocation7 [shape = 's32[2]{0}', space=sflag, size = 0x8, scoped, tag = 'scoped memory for tpu_custom_call.1']
    #allocation8 [shape = 'u8[1024]{0}', space=vmem, size = 0x400, scoped, tag = 'output window, operand 0']
    %7 = vsyncpa [#allocation4], 0
    %s8 = scalar_lea.sflag [#allocation4], 1
    %9 = vsyncpa %s8, 0
    %10 = vsyncpa [#allocation7], 0
    %s11 = scalar_lea.sflag [#allocation7], 1
    %12 = vsyncpa %s11, 0
    %13 = vsyncpa [#allocation5], 0
    %s14 = scalar_lea.sflag [#allocation5], 1
    %15 = vsyncpa %s14, 0
    loop: start=0, step=1, limit=4
    $region2: #{tpu_custom_call.1} parent=1 // loop_pre_header
      _
    $region3: #{tpu_custom_call.1} parent=1 // loop_header
      %s17 = sphi 0, %s21
      %p18 = scmp.ge.s32.totalorder %s17, 4
      %s24 = sphi 0, %s36
      %s25 = sphi 0, %s32
      %s26 = sphi 0, %s24
      %s27 = sphi 0, %s25
      %s28 = sphi 0, %s26
      %s29 = sphi 0, %s27
      %s41 = sphi 0, %s43
      %s44 = sphi 0, %s41
      %s45 = sphi 0, %s44
      %s61 = sphi 0, %s45
      %s69 = sphi 0, %s71
      %s72 = sphi 0, %s69
      %s73 = sphi 0, %s72
      %s89 = sphi 0, %s73
      %s95 = sphi 0, %s97
      %s98 = sphi 0, %s95
      %s99 = sphi 0, %s98
      %s115 = sphi 0, %s99
    $region4: #{tpu_custom_call.1} parent=1 // loop_header_branch
      %20 = sbr.rel (%p18) target = $region8
    $region5: #{tpu_custom_call.1} parent=1 // loop_body
      %s22 = ssub.s32 %s17, 1
      %s23 = ssub.s32 %s17, 2
      %s30 = sadd.s32 1, %s25
      %p31 = scmp.ge.s32.totalorder %s30, 1
      %s32 = scalar_select %p31, 0, %s30
      %s33 = sadd.s32 1, %s24
      %s34 = scalar_select %p31, %s33, %s24
      %p35 = scmp.ge.s32.totalorder %s34, 2
      %s36 = scalar_select %p35, 0, %s34
      %s37 = ssub.s32 %s24, %s36
      %s38 = ssub.s32 %s25, %s32
      %s39 = sor.u32 %s37, %s38
      %p40 = scmp.eq.s32.totalorder %s39, 0
      %s42 = sadd.s32 %s41, 1
      %s43 = scalar_select %p40, %s41, %s42
      %p46 = pneg %p40
      %p47 = scmp.eq.s32.totalorder %s17, 1
      %p48 = por %p46, %p47
      %p49 = scmp.ne.s32.totalorder %s41, %s44
      %p50 = scmp.eq.s32.totalorder %s17, 0
      %p51 = por %p49, %p50
      %p52 = scmp.ne.s32.totalorder %s41, %s44
      %p53 = scmp.eq.s32.totalorder %s22, 1
      %p54 = por %p52, %p53
      %p55 = scmp.ne.s32.totalorder %s44, %s45
      %p56 = scmp.eq.s32.totalorder %s22, 0
      %p57 = por %p55, %p56
      %p58 = scmp.ne.s32.totalorder %s44, %s45
      %p59 = scmp.eq.s32.totalorder %s23, 1
      %p60 = por %p58, %p59
      %p62 = scmp.ne.s32.totalorder %s45, %s61
      %p63 = scmp.eq.s32.totalorder %s23, 0
      %p64 = por %p62, %p63
      %s65 = ssub.s32 %s24, %s36
      %s66 = ssub.s32 %s25, %s32
      %s67 = sor.u32 %s65, %s66
      %p68 = scmp.eq.s32.totalorder %s67, 0
      %s70 = sadd.s32 %s69, 1
      %s71 = scalar_select %p68, %s69, %s70
      %p74 = pneg %p68
      %p75 = scmp.eq.s32.totalorder %s17, 1
      %p76 = por %p74, %p75
      %p77 = scmp.ne.s32.totalorder %s69, %s72
      %p78 = scmp.eq.s32.totalorder %s17, 0
      %p79 = por %p77, %p78
      %p80 = scmp.ne.s32.totalorder %s69, %s72
      %p81 = scmp.eq.s32.totalorder %s22, 1
      %p82 = por %p80, %p81
      %p83 = scmp.ne.s32.totalorder %s72, %s73
      %p84 = scmp.eq.s32.totalorder %s22, 0
      %p85 = por %p83, %p84
      %p86 = scmp.ne.s32.totalorder %s72, %s73
      %p87 = scmp.eq.s32.totalorder %s23, 1
      %p88 = por %p86, %p87
      %p90 = scmp.ne.s32.totalorder %s73, %s89
      %p91 = scmp.eq.s32.totalorder %s23, 0
      %p92 = por %p90, %p91
      %s93 = ssub.s32 %s24, %s36
      %p94 = scmp.eq.s32.totalorder %s93, 0
      %s96 = sadd.s32 %s95, 1
      %s97 = scalar_select %p94, %s95, %s96
      %p100 = pneg %p94
      %p101 = scmp.eq.s32.totalorder %s17, 1
      %p102 = por %p100, %p101
      %p103 = scmp.ne.s32.totalorder %s95, %s98
      %p104 = scmp.eq.s32.totalorder %s17, 0
      %p105 = por %p103, %p104
      %p106 = scmp.ne.s32.totalorder %s95, %s98
      %p107 = scmp.eq.s32.totalorder %s22, 1
      %p108 = por %p106, %p107
      %p109 = scmp.ne.s32.totalorder %s98, %s99
      %p110 = scmp.eq.s32.totalorder %s22, 0
      %p111 = por %p109, %p110
      %p112 = scmp.ne.s32.totalorder %s98, %s99
      %p113 = scmp.eq.s32.totalorder %s23, 1
      %p114 = por %p112, %p113
      %p116 = scmp.ne.s32.totalorder %s99, %s115
      %p117 = scmp.eq.s32.totalorder %s23, 0
      %p118 = por %p116, %p117
      %p119 = scmp.le.s32.totalorder 1, %s17
      %p120 = scmp.lt.s32.totalorder %s17, 3
      %p121 = pnand %p119, %p120
      %p122 = pneg %p121
      // Predicated region
      $region9: #{tpu_custom_call.1} parent=5 // pred_check
        _
      $region10: #{tpu_custom_call.1} parent=5 // pred_check_branch
        %124 = sbr.rel (%p121) target = $region12
      $region11: #{tpu_custom_call.1} parent=5 // pred_region
        %s125 = ssub.s32 %s17, 1
      $region12: #{tpu_custom_call.1} parent=5 // pred_fallthru
        _
      %p126 = scmp.lt.s32.totalorder %s17, 2
      // Predicated region
      $region13: #{tpu_custom_call.1} parent=5 // pred_check
        %p127 = pneg %p126
      $region14: #{tpu_custom_call.1} parent=5 // pred_check_branch
        %129 = sbr.rel (%p127) target = $region16
      $region15: #{tpu_custom_call.1} parent=5 // pred_region
        // Predicated region
        $region17: #{tpu_custom_call.1} parent=15 // pred_check
          %p130 = pneg %p51
        $region18: #{tpu_custom_call.1} parent=15 // pred_check_branch
          %132 = sbr.rel (%p130) target = $region20
        $region19: #{tpu_custom_call.1} parent=15 // pred_region
          %s133 = sand.u32 %s41, 1
          %s134 = scalar_lea.sflag [#allocation4], %s133
          %s135 = sand.u32 %s41, 1
          %s136 = smul.addr %s135, 8
          %s137 = scalar_lea.vmem [#allocation3], %s136
          %s138 = smul.u32 2, %s25
          %s140 = ssub.s32 128, 128
          %141 = vsyncadd %s134, %s140
          %s142 = smul.addr %s24, 2
          %s143 = sadd.s32 %s138, %s142
          %s144 = smul.addr %s143, 64
          %s145 = scalar_lea.hbm %s0, %s144
          %s147 = sshll.u32 %s137, 4
          %s148 = int_to_ptr.vmem [resolvable:$true] %s147
          %150 = dma.hbm_to_vmem [thread:$0]  %s145, 128, %s148, %s134
        $region20: #{tpu_custom_call.1} parent=15 // pred_fallthru
          _
        // Predicated region
        $region21: #{tpu_custom_call.1} parent=15 // pred_check
          %p151 = pneg %p79
        $region22: #{tpu_custom_call.1} parent=15 // pred_check_branch
          %153 = sbr.rel (%p151) target = $region24
        $region23: #{tpu_custom_call.1} parent=15 // pred_region
          %s154 = sand.u32 %s69, 1
          %s155 = scalar_lea.sflag [#allocation7], %s154
          %s156 = sand.u32 %s69, 1
          %s157 = smul.addr %s156, 2
          %s158 = scalar_lea.vmem [#allocation6], %s157
          %s159 = smul.u32 2, %s25
          %s161 = ssub.s32 32, 32
          %162 = vsyncadd %s155, %s161
          %s163 = smul.addr %s24, 2
          %s164 = sadd.s32 %s159, %s163
          %s165 = smul.addr %s164, 16
          %s166 = scalar_lea.hbm %s1, %s165
          %s168 = sshll.u32 %s158, 4
          %s169 = int_to_ptr.vmem [resolvable:$true] %s168
          %171 = dma.hbm_to_vmem [thread:$0]  %s166, 32, %s169, %s155
        $region24: #{tpu_custom_call.1} parent=15 // pred_fallthru
          _
      $region16: #{tpu_custom_call.1} parent=5 // pred_fallthru
        _
      %p172 = scmp.le.s32.totalorder 1, %s17
      %p173 = scmp.lt.s32.totalorder %s17, 3
      %p174 = pnand %p172, %p173
      %p175 = pneg %p174
      // Predicated region
      $region25: #{tpu_custom_call.1} parent=5 // pred_check
        _
      $region26: #{tpu_custom_call.1} parent=5 // pred_check_branch
        %177 = sbr.rel (%p174) target = $region28
      $region27: #{tpu_custom_call.1} parent=5 // pred_region
        %s178 = ssub.s32 %s17, 1
        %s179 = sand.u32 %s44, 1
        %s180 = scalar_lea.sflag [#allocation4], %s179
        %s181 = sand.u32 %s44, 1
        %s182 = smul.addr %s181, 8
        %s183 = scalar_lea.vmem [#allocation3], %s182
        // Predicated region
        $region29: #{tpu_custom_call.1} parent=27 // pred_check
          %p184 = pneg %p57
        $region30: #{tpu_custom_call.1} parent=27 // pred_check_branch
          %186 = sbr.rel (%p184) target = $region32
        $region31: #{tpu_custom_call.1} parent=27 // pred_region
          %187 = dma.done %s180, 128
        $region32: #{tpu_custom_call.1} parent=27 // pred_fallthru
          _
        %s188 = sand.u32 %s72, 1
        %s189 = scalar_lea.sflag [#allocation7], %s188
        %s190 = sand.u32 %s72, 1
        %s191 = smul.addr %s190, 2
        %s192 = scalar_lea.vmem [#allocation6], %s191
        // Predicated region
        $region33: #{tpu_custom_call.1} parent=27 // pred_check
          %p193 = pneg %p85
        $region34: #{tpu_custom_call.1} parent=27 // pred_check_branch
          %195 = sbr.rel (%p193) target = $region36
        $region35: #{tpu_custom_call.1} parent=27 // pred_region
          %196 = dma.done %s189, 32
        $region36: #{tpu_custom_call.1} parent=27 // pred_fallthru
          _
        %s197 = sand.u32 %s44, 1
        %s198 = scalar_lea.sflag [#allocation4], %s197
        %s199 = sand.u32 %s44, 1
        %s200 = smul.addr %s199, 8
        %s201 = scalar_lea.vmem [#allocation3], %s200
        %p202 = pneg %p57
        %p203 = pneg %p54
        %s204 = sand.u32 %s72, 1
        %s205 = scalar_lea.sflag [#allocation7], %s204
        %s206 = sand.u32 %s72, 1
        %s207 = smul.addr %s206, 2
        %s208 = scalar_lea.vmem [#allocation6], %s207
        %p209 = pneg %p85
        %p210 = pneg %p82
        %p211 = pneg %p111
        %p212 = pneg %p108
        %s213 = sand.u32 %s98, 1
        %s214 = scalar_lea.sflag [#allocation5], %s213
        %s215 = sand.u32 %s98, 1
        %s216 = scalar_lea.vmem [#allocation8], %s215
        %s217 = smul.u32 2, %s27
        %s218 = smul.u32 2, %s27
        %p219 = scmp.eq.s32.totalorder %s27, 0
        // Predicated region
        $region37: #{tpu_custom_call.1} parent=27 // pred_check
          %p220 = pneg %p219
        $region38: #{tpu_custom_call.1} parent=27 // pred_check_branch
          %222 = sbr.rel (%p220) target = $region40
        $region39: #{tpu_custom_call.1} parent=27 // pred_region
          %223 = vst [vmem:[#allocation2] sm:$0xff] 0
        $region40: #{tpu_custom_call.1} parent=27 // pred_fallthru
          _
        %v224 = vld [vmem:[%s183] sm:$0xff]
        %v225 = vld [vmem:[%s192] sm:$0x3]
        %v226 = vlaneseq
        %v227 = vshrl.u32 %v226, 7
        %v229 = vcombine.high %v224, %v224
        %vm231 = vcmask 1043456
        %v232 = vsel %vm231, %v224, -inf
        %v233 = vrot.slane %v232, 4
        %v234 = vmax.f32 %v232, %v233
        %v235 = vrot.slane %v234, 2
        %v236 = vmax.f32 %v234, %v235
        %v237 = vrot.slane %v236, 1
        %v238 = vmax.f32 %v236, %v237
        %v239 = vsel %vm231, %v229, -inf
        %v240 = vrot.slane %v239, 4
        %v241 = vmax.f32 %v239, %v240
        %v242 = vrot.slane %v241, 2
        %v243 = vmax.f32 %v241, %v242
        %v244 = vrot.slane %v243, 1
        %v245 = vmax.f32 %v243, %v244
        %v248 = vcombine.low %v238, %v245
        %vm250 = vcmp.eq.f32.partialorder %v224, %v248
        %v252 = vunpack.c.l.s4 839922192
        %v253 = vunpack.c.0.s8 %v252
        %v254 = vlaneseq
        %v255 = vshrl.u32 %v254, 7
        %v256 = vsub.s32 %v253, %v255
        %v257 = vrot.slane %v227, %v256
        %v258 = vsel %vm250, %v257, 4
        %v259 = vcombine.high %v258, %v258
        %v260 = vsel %vm231, %v258, 2147483647
        %v261 = vrot.slane %v260, 4
        %vm262 = vcmp.lt.s32.totalorder %v260, %v261
        %v263 = vsel %vm262, %v260, %v261
        %v264 = vrot.slane %v263, 2
        %vm265 = vcmp.lt.s32.totalorder %v263, %v264
        %v266 = vsel %vm265, %v263, %v264
        %v267 = vrot.slane %v266, 1
        %vm268 = vcmp.lt.s32.totalorder %v266, %v267
        %v269 = vsel %vm268, %v266, %v267
        %v270 = vsel %vm231, %v259, 2147483647
        %v271 = vrot.slane %v270, 4
        %vm272 = vcmp.lt.s32.totalorder %v270, %v271
        %v273 = vsel %vm272, %v270, %v271
        %v274 = vrot.slane %v273, 2
        %vm275 = vcmp.lt.s32.totalorder %v273, %v274
        %v276 = vsel %vm275, %v273, %v274
        %v277 = vrot.slane %v276, 1
        %vm278 = vcmp.lt.s32.totalorder %v276, %v277
        %v279 = vsel %vm278, %v276, %v277
        %v280 = vlaneseq
        %v281 = vshrl.u32 %v280, 7
        %v282 = vsub.s32 0, %v281
        %v283 = vrot.slane %v225, %v282
        %v284 = vlaneseq
        %v285 = vshrl.u32 %v284, 7
        %v286 = vsub.s32 1, %v285
        %v287 = vrot.slane %v225, %v286
        %vm288 = vcmp.eq.s32.totalorder %v269, %v283
        %vm289 = vcmp.eq.s32.totalorder %v279, %v287
        %vm290 = vcmp.eq.s32.totalorder %v227, %v283
        %vm291 = vcmp.eq.s32.totalorder %v227, %v287
        %v292 = vsel %vm288, 1, 0
        %v293 = vsel %vm289, 1, 0
        %v294 = vlaneseq
        %v295 = vshrl.u32 %v294, 7
        %v296 = vsub.s32 0, %v295
        %v297 = vrot.slane %v292, %v296
        %v298 = vlaneseq
        %v299 = vshrl.u32 %v298, 7
        %v300 = vsub.s32 0, %v299
        %v301 = vrot.slane %v293, %v300
        %vm302 = vcmp.eq.s32.totalorder %v297, 1
        %vm303 = vcmp.eq.s32.totalorder %v301, 1
        %vm304 = vmand %vm290, %vm302
        %vm305 = vmand %vm291, %vm303
        %v306 = vld [vmem:[#allocation2] sm:$0xff]
        %v307 = vsel %vm304, 1, 0
        %v308 = vsel %vm305, 1, 0
        %v309 = vcombine.low %v307, %v308
        %v310 = vadd.s32 %v306, %v309
        %311 = vst [vmem:[#allocation2] sm:$0xff] %v310
        // Predicated region
        $region41: #{tpu_custom_call.1} parent=27 // pred_check
          %p312 = pneg %p219
        $region42: #{tpu_custom_call.1} parent=27 // pred_check_branch
          %314 = sbr.rel (%p312) target = $region44
        $region43: #{tpu_custom_call.1} parent=27 // pred_region
          %v315 = vld [vmem:[#allocation2] sm:$0xff]
          %v316 = vcombine.high %v315, %v315
          %v317 = vsel %vm231, %v315, 0
          %v318 = vsel %vm231, %v316, 0
          %v319 = vadd.s32 %v317, %v318
          %v320 = vand.u32 %v319, 65535
          %v321 = vshrl.u32 %v319, 16
          %v322 = vcvt.s32.f32 %v320
          %v323 = vcvt.s32.f32 %v321
          %324 = vadd.xlane.f32.xlu0 %v322
          %v325 = vpop.xlane.xlu0 %324
          %326 = vadd.xlane.f32.xlu0 %v323
          %v327 = vpop.xlane.xlu0 %326
          %v328 = vcvt.f32.s32 %v325
          %v329 = vcvt.f32.s32 %v327
          %v330 = vshll.u32 %v329, 16
          %v331 = vadd.s32 %v330, %v328
          %v332 = vlaneseq
          %v333 = vand.u32 %v332, 127
          %v334 = vlaneseq
          %v335 = vshrl.u32 %v334, 7
          %v336 = vsub.s32 %v333, %v335
          %v337 = vrot.slane %v331, %v336
          %vm338 = vcmask 24576
          %339 = vst.msk [vmem:[%s216] sm:$0x1] %vm338, %v337
        $region44: #{tpu_custom_call.1} parent=27 // pred_fallthru
          _
        %s340 = sand.u32 %s98, 1
        %s341 = scalar_lea.sflag [#allocation5], %s340
        %s342 = sand.u32 %s98, 1
        %s343 = scalar_lea.vmem [#allocation8], %s342
        // Predicated region
        $region45: #{tpu_custom_call.1} parent=27 // pred_check
          %p344 = pneg %p108
        $region46: #{tpu_custom_call.1} parent=27 // pred_check_branch
          %346 = sbr.rel (%p344) target = $region48
        $region47: #{tpu_custom_call.1} parent=27 // pred_region
          %s348 = ssub.s32 16, 16
          %349 = vsyncadd %s341, %s348
          %s350 = smul.addr %s26, 16
          %s351 = scalar_lea.hbm %s2, %s350
          %s353 = sshll.u32 %s343, 4
          %s354 = int_to_ptr.vmem [resolvable:$true] %s353
          %356 = dma.vmem_to_hbm [thread:$0]  %s354, 16, %s351, %s341
        $region48: #{tpu_custom_call.1} parent=27 // pred_fallthru
          _
      $region28: #{tpu_custom_call.1} parent=5 // pred_fallthru
        _
      %p357 = scmp.le.s32.totalorder 2, %s17
      // Predicated region
      $region49: #{tpu_custom_call.1} parent=5 // pred_check
        %p358 = pneg %p357
      $region50: #{tpu_custom_call.1} parent=5 // pred_check_branch
        %360 = sbr.rel (%p358) target = $region52
      $region51: #{tpu_custom_call.1} parent=5 // pred_region
        %s361 = ssub.s32 %s17, 2
        // Predicated region
        $region53: #{tpu_custom_call.1} parent=51 // pred_check
          %p362 = pneg %p114
        $region54: #{tpu_custom_call.1} parent=51 // pred_check_branch
          %364 = sbr.rel (%p362) target = $region56
        $region55: #{tpu_custom_call.1} parent=51 // pred_region
          %s365 = sand.u32 %s99, 1
          %s366 = scalar_lea.sflag [#allocation5], %s365
          %s367 = sand.u32 %s99, 1
          %s368 = scalar_lea.vmem [#allocation8], %s367
          %369 = dma.done %s366, 16
        $region56: #{tpu_custom_call.1} parent=51 // pred_fallthru
          _
      $region52: #{tpu_custom_call.1} parent=5 // pred_fallthru
        _
    $region6: #{tpu_custom_call.1} parent=1 // loop_footer
      %s21 = sadd.s32 1, %s17
    $region7: #{tpu_custom_call.1} parent=1 // loop_footer_branch
      %16 = sbr.rel target = $region3
    $region8: #{tpu_custom_call.1} parent=1 // loop_exit
      _
    %370 = vsyncpa [#allocation4], 1
    %s371 = scalar_lea.sflag [#allocation4], 1
    %372 = vsyncpa %s371, 1
    %373 = vsyncpa [#allocation7], 1
    %s374 = scalar_lea.sflag [#allocation7], 1
    %375 = vsyncpa %s374, 1
    %376 = vsyncpa [#allocation5], 1
    %s377 = scalar_lea.sflag [#allocation5], 1
    %378 = vsyncpa %s377, 1

</llo_original>
